<compile_context>
chip_gen: v7x
topology: tpu7x:2x2x1
jax: 0.10.0
libtpu: 0.0.40
codegen_flags: <defaults>
</compile_context>

<pallas_src>
import functools

import numpy as np

import jax
import jax.numpy as jnp
from jax.experimental import pallas as pl
from jax.experimental.pallas import tpu as pltpu

_LANE = 128      # lane width: hidden/output feature dims padded to multiples of this
_SUBLANE = 8     # sublane width: batch tiles rounded to multiples of this


def _round_up(n, m):
    return (n + m - 1) // m * m


def _nbytes(shape, dtype):
    return int(np.prod(shape)) * np.dtype(dtype).itemsize


# --------------------------------------------------------------------------- kernel
def _make_mlp_kernel(depth):
    """Kernel computing the full MLP for one batch tile.

    Ref order: x_ref, (w0, b0, w1, b1, ..., w_{d-1}, b_{d-1}), out_ref.
    Tanh after every layer except the last (matches the PyTorch DNN module).
    """

    def kernel(*refs):
        x_ref = refs[0]
        out_ref = refs[-1]
        params = refs[1:-1]

        h = x_ref[...]                                      # (tb, in_dim), f32
        for i in range(depth):
            w = params[2 * i][...]
            b = params[2 * i + 1][...].astype(jnp.float32)  # (1, N) row, read once
            # Feed the MXU in the weights' dtype (bf16 fast path) and accumulate in
            # f32.  `h` stays f32 between layers so tanh uses the f32 VPU/EUP path.
            h = jnp.dot(h.astype(w.dtype), w, preferred_element_type=jnp.float32) + b
            if i < depth - 1:
                h = jnp.tanh(h)
        out_ref[...] = h.astype(out_ref.dtype)

    return kernel


# ------------------------------------------------------------------------- params
def init_dnn_params(key, layers):
    """torch.nn.Linear-style init: U(-1/sqrt(fan_in), +1/sqrt(fan_in)).

    Weights stored (in, out) so the kernel computes x @ W + b, numerically identical
    to torch's x @ W.T + b with W_torch = W.T.
    """
    weights, biases = [], []
    depth = len(layers) - 1
    for i in range(depth):
        fan_in, fan_out = layers[i], layers[i + 1]
        key, kw, kb = jax.random.split(key, 3)
        bound = 1.0 / np.sqrt(fan_in)
        weights.append(jax.random.uniform(kw, (fan_in, fan_out), jnp.float32, -bound, bound))
        biases.append(jax.random.uniform(kb, (fan_out,), jnp.float32, -bound, bound))
    return weights, biases


def prepare_params(weights, biases, param_dtype=jnp.bfloat16):
    """Pad hidden/output feature dims to multiples of 128 and cast to param_dtype.

    The layer-0 contraction dim stays UN-padded so the kernel can dot against the
    raw (un-padded) input block.  Padding is exact: padded weight rows/cols and bias
    lanes are zero, so padded hidden activations are tanh(0) == 0 through every
    layer and padded output columns are exactly zero (sliced off in the wrapper).
    Pass param_dtype=jnp.float32 for full-precision (no bf16 rounding) semantics.
    """
    pw, pb = [], []
    for i, (w, b) in enumerate(zip(weights, biases)):
        di, do = w.shape
        dip = di if i == 0 else _round_up(di, _LANE)
        dop = _round_up(do, _LANE)
        wp = jnp.zeros((dip, dop), param_dtype).at[:di, :do].set(w.astype(param_dtype))
        bpad = jnp.zeros((1, dop), jnp.float32).at[:, :do].set(
            b.reshape(1, -1).astype(jnp.float32))
        pw.append(wp)
        pb.append(bpad)
    return pw, pb


# ------------------------------------------------------------------------ forward
@functools.partial(
    jax.jit, static_argnames=("out_dim", "block_batch", "out_dtype", "return_padded"))
def dnn_forward(x, weights, biases, *, out_dim, block_batch=1024,
                out_dtype=None, return_padded=False):
    """Forward pass.

    x: (B, in_features) un-padded.  weights/biases: padded params from prepare_params.
    Returns (B, out_dim) (or the padded (bp, out_p) slab if return_padded=True; its
    padded rows/cols are NOT zero -- slice before any reduction).
    """
    depth = len(weights)
    B, in_dim = x.shape
    assert weights[0].shape[0] == in_dim, "layer-0 weight must keep un-padded in_dim rows"
    out_p = weights[-1].shape[1]
    out_dtype = x.dtype if out_dtype is None else out_dtype

    # ---- batch tile selection ------------------------------------------------
    B_r = _round_up(B, _SUBLANE)
    tb = min(block_batch, B_r)
    # v7x has 2 TensorCores per chip; the "parallel" batch axis only shards across
    # them if the grid has >= 2 steps, so never let one tile swallow the batch.
    if B_r >= 2 * _SUBLANE and tb >= B_r:
        tb = _round_up(B_r // 2, _SUBLANE)
    # Cap the per-layer live activation set (f32 h + bf16 cast copy ~ 6 B/elem):
    # shrinking tb is cheaper than letting Mosaic spill vld/vst traffic.
    max_wp = max(int(w.shape[1]) for w in weights)
    act_cap_tb = max(_SUBLANE, ((8 << 20) // (6 * max_wp)) // _SUBLANE * _SUBLANE)
    tb = max(_SUBLANE, min(tb, act_cap_tb))
    bp = _round_up(B, tb)

    # Batch-only padding (cheap, and only when needed).  Feature dims of x are NOT
    # padded any more: the input block's last dim equals the full array dim.
    x_in = x if bp == B else jnp.zeros((bp, in_dim), x.dtype).at[:B].set(x)

    kernel = _make_mlp_kernel(depth)

    in_specs = [pl.BlockSpec((tb, in_dim), lambda i: (i, 0))]

    param_bytes = (sum(_nbytes(w.shape, w.dtype) for w in weights)
                   + sum(_nbytes(b.shape, b.dtype) for b in biases))
    # Constant index_map blocks never re-fetch, but default pipelining still
    # allocates two VMEM buffers per param.  Single-buffer them once the resident
    # weights are large enough for that to matter (the fit/no-fit difference for
    # ~2-4K-wide layers, especially on v7x's 64 MiB VMEM/TC).  For tiny nets keep
    # the default path.
    # TODO(synk): for layer widths >= ~4096 switch resident weights to a K-tiled
    # grid / pltpu.emit_pipeline instead of whole-block residency.
    single_buffer_weights = param_bytes > (4 << 20)

    flat_params = []
    for w, b in zip(weights, biases):
        if single_buffer_weights:
            in_specs.append(pl.BlockSpec(w.shape, lambda i: (0, 0),
                                         pipeline_mode=pl.Buffered(1)))
            in_specs.append(pl.BlockSpec(b.shape, lambda i: (0, 0),
                                         pipeline_mode=pl.Buffered(1)))
        else:
            in_specs.append(pl.BlockSpec(w.shape, lambda i: (0, 0)))
            in_specs.append(pl.BlockSpec(b.shape, lambda i: (0, 0)))
        flat_params += [w, b]

    # Output stays padded to a 128-multiple width -> unmasked full-lane stores.
    out_spec = pl.BlockSpec((tb, out_p), lambda i: (i, 0))

    # ---- explicit VMEM budget (v5e scoped default 16 MiB; v7x physical 64 MiB) --
    weight_bufs = 1 if single_buffer_weights else 2
    stream_bytes = 2 * (_nbytes((tb, in_dim), x.dtype) + _nbytes((tb, out_p), out_dtype))
    act_bytes = 6 * tb * max_wp
    vmem_need = weight_bufs * param_bytes + stream_bytes + act_bytes
    vmem_limit_bytes = int(min(max(2 * vmem_need + (2 << 20), 32 << 20), 60 << 20))

    flops = 2 * bp * sum(int(w.shape[0]) * int(w.shape[1]) for w in weights)
    transcendentals = bp * sum(int(w.shape[1]) for w in weights[:-1])
    bytes_accessed = (_nbytes((bp, in_dim), x.dtype) + param_bytes
                      + _nbytes((bp, out_p), out_dtype))

    out_padded = pl.pallas_call(
        kernel,
        out_shape=jax.ShapeDtypeStruct((bp, out_p), out_dtype),
        grid_spec=pltpu.PrefetchScalarGridSpec(
            num_scalar_prefetch=0,
            grid=(bp // tb,),
            in_specs=in_specs,
            out_specs=out_spec,
        ),
        compiler_params=pltpu.CompilerParams(
            dimension_semantics=("parallel",),
            vmem_limit_bytes=vmem_limit_bytes,
        ),
        cost_estimate=pl.CostEstimate(
            flops=flops,
            transcendentals=transcendentals,
            bytes_accessed=bytes_accessed,
        ),
    )(x_in, *flat_params)

    if return_padded:
        # NOTE: padded rows (>= B) and padded cols (>= out_dim) are NOT zero (they
        # carry tanh-of-bias values) -- slice before any reduction over this slab.
        return out_padded
    return out_padded[:B, :out_dim]


# ---------------------------------------------------------------------- references
def ref_forward_exact(x, weights, biases):
    """Pure-JAX reference with the ORIGINAL f32 params (PyTorch DNN semantics)."""
    h = x
    for i, (w, b) in enumerate(zip(weights, biases)):
        h = h @ w + b.reshape(1, -1)
        if i < len(weights) - 1:
            h = jnp.tanh(h)
    return h


def ref_forward_padded(x, pweights, pbiases, out_dim):
    """Pure-JAX reference mirroring the kernel's padded / bf16-weight math."""
    h = x
    for i, (w, b) in enumerate(zip(pweights, pbiases)):
        h = jnp.dot(h.astype(w.dtype), w, preferred_element_type=jnp.float32) + b
        if i < len(pweights) - 1:
            h = jnp.tanh(h)
    return h[:, :out_dim].astype(x.dtype)


# --------------------------------------------------------------------------- main
if __name__ == "__main__":
    # Small MLP consistent with DNN(layers): layers = [16, 64, 64, 8]
    layers = [16, 64, 64, 8]
    batch = 256

    key = jax.random.PRNGKey(0)
    key, kx = jax.random.split(key)
    x = jax.random.normal(kx, (batch, layers[0]), jnp.float32)
    weights, biases = init_dnn_params(key, layers)

    # bf16 weights (f32 accumulation in-kernel); hidden/output dims padded to 128.
    pw, pb = prepare_params(weights, biases, param_dtype=jnp.bfloat16)

    out = dnn_forward(x, pw, pb, out_dim=layers[-1], block_batch=1024)
    out = jax.block_until_ready(out)
    assert out.shape == (batch, layers[-1])

    # 1) Tight check against a pure-JAX reference doing the same padded/bf16 math.
    ref_q = ref_forward_padded(x, pw, pb, layers[-1])
    err_q = float(jnp.max(jnp.abs(out - ref_q)))
    assert jnp.allclose(out, ref_q, atol=5e-3, rtol=5e-3), err_q

    # 2) Loose check against the original f32 PyTorch-equivalent semantics
    #    (difference is only bf16 rounding).
    ref = ref_forward_exact(x, weights, biases)
    err = float(jnp.max(jnp.abs(out - ref)))
    assert jnp.allclose(out, ref, atol=3e-2, rtol=3e-2), err

    print("KERNEL_OK")
</pallas_src>

<mosaic_0001>
module attributes {stable_mosaic.version = 11 : i64} {
  func.func @kernel(%arg0: i32, %arg1: memref<128x16xf32, #tpu.memory_space<vmem>>, %arg2: memref<16x128xbf16, #tpu.memory_space<vmem>>, %arg3: memref<1x128xf32, #tpu.memory_space<vmem>>, %arg4: memref<128x128xbf16, #tpu.memory_space<vmem>>, %arg5: memref<1x128xf32, #tpu.memory_space<vmem>>, %arg6: memref<128x128xbf16, #tpu.memory_space<vmem>>, %arg7: memref<1x128xf32, #tpu.memory_space<vmem>>, %arg8: memref<128x128xf32, #tpu.memory_space<vmem>>) attributes {dimension_semantics = [#tpu.dimension_semantics<parallel>], iteration_bounds = array<i64: 2>, scalar_prefetch = 0 : i64, scratch_operands = 0 : i64, tpu.core_type = #tpu.core_type<tc>, window_params = [{transform_indices = @transform_0, window_bounds = array<i64: 128, 16>}, {pipeline_mode = #tpu.pipeline_mode<synchronous>, transform_indices = @transform_1, window_bounds = array<i64: 16, 128>}, {pipeline_mode = #tpu.pipeline_mode<synchronous>, transform_indices = @transform_2, window_bounds = array<i64: 1, 128>}, {pipeline_mode = #tpu.pipeline_mode<synchronous>, transform_indices = @transform_3, window_bounds = array<i64: 128, 128>}, {pipeline_mode = #tpu.pipeline_mode<synchronous>, transform_indices = @transform_4, window_bounds = array<i64: 1, 128>}, {pipeline_mode = #tpu.pipeline_mode<synchronous>, transform_indices = @transform_5, window_bounds = array<i64: 128, 128>}, {pipeline_mode = #tpu.pipeline_mode<synchronous>, transform_indices = @transform_6, window_bounds = array<i64: 1, 128>}, {transform_indices = @transform_7, window_bounds = array<i64: 128, 128>}]} {
    %c0 = arith.constant 0 : index
    %c0_0 = arith.constant 0 : index
    %0 = vector.load %arg1[%c0, %c0_0] : memref<128x16xf32, #tpu.memory_space<vmem>>, vector<128x16xf32>
    %c0_1 = arith.constant 0 : index
    %c0_2 = arith.constant 0 : index
    %1 = vector.load %arg2[%c0_1, %c0_2] : memref<16x128xbf16, #tpu.memory_space<vmem>>, vector<16x128xbf16>
    %c0_3 = arith.constant 0 : index
    %c0_4 = arith.constant 0 : index
    %2 = vector.load %arg3[%c0_3, %c0_4] : memref<1x128xf32, #tpu.memory_space<vmem>>, vector<1x128xf32>
    %3 = arith.truncf %0 : vector<128x16xf32> to vector<128x16xbf16>
    %cst = arith.constant dense<0.000000e+00> : vector<128x128xf32>
    %4 = tpu.matmul %3, %1, %cst {dimension_numbers = #tpu.dot_dimension_numbers<[1], [0], [0], [1], [0, 0, 1, 1], [], []>} : vector<128x16xbf16>, vector<16x128xbf16>, vector<128x128xf32> -> vector<128x128xf32>
    %5 = vector.broadcast %2 : vector<1x128xf32> to vector<128x128xf32>
    %6 = arith.addf %4, %5 : vector<128x128xf32>
    %7 = math.tanh %6 : vector<128x128xf32>
    %c0_5 = arith.constant 0 : index
    %c0_6 = arith.constant 0 : index
    %8 = vector.load %arg4[%c0_5, %c0_6] : memref<128x128xbf16, #tpu.memory_space<vmem>>, vector<128x128xbf16>
    %c0_7 = arith.constant 0 : index
    %c0_8 = arith.constant 0 : index
    %9 = vector.load %arg5[%c0_7, %c0_8] : memref<1x128xf32, #tpu.memory_space<vmem>>, vector<1x128xf32>
    %10 = arith.truncf %7 : vector<128x128xf32> to vector<128x128xbf16>
    %cst_9 = arith.constant dense<0.000000e+00> : vector<128x128xf32>
    %11 = tpu.matmul %10, %8, %cst_9 {dimension_numbers = #tpu.dot_dimension_numbers<[1], [0], [0], [1], [0, 0, 1, 1], [], []>} : vector<128x128xbf16>, vector<128x128xbf16>, vector<128x128xf32> -> vector<128x128xf32>
    %12 = vector.broadcast %9 : vector<1x128xf32> to vector<128x128xf32>
    %13 = arith.addf %11, %12 : vector<128x128xf32>
    %14 = math.tanh %13 : vector<128x128xf32>
    %c0_10 = arith.constant 0 : index
    %c0_11 = arith.constant 0 : index
    %15 = vector.load %arg6[%c0_10, %c0_11] : memref<128x128xbf16, #tpu.memory_space<vmem>>, vector<128x128xbf16>
    %c0_12 = arith.constant 0 : index
    %c0_13 = arith.constant 0 : index
    %16 = vector.load %arg7[%c0_12, %c0_13] : memref<1x128xf32, #tpu.memory_space<vmem>>, vector<1x128xf32>
    %17 = arith.truncf %14 : vector<128x128xf32> to vector<128x128xbf16>
    %cst_14 = arith.constant dense<0.000000e+00> : vector<128x128xf32>
    %18 = tpu.matmul %17, %15, %cst_14 {dimension_numbers = #tpu.dot_dimension_numbers<[1], [0], [0], [1], [0, 0, 1, 1], [], []>} : vector<128x128xbf16>, vector<128x128xbf16>, vector<128x128xf32> -> vector<128x128xf32>
    %19 = vector.broadcast %16 : vector<1x128xf32> to vector<128x128xf32>
    %20 = arith.addf %18, %19 : vector<128x128xf32>
    %c0_15 = arith.constant 0 : index
    %c0_16 = arith.constant 0 : index
    %21 = vector.load %arg8[%c0_15, %c0_16] : memref<128x128xf32, #tpu.memory_space<vmem>>, vector<128x128xf32>
    tpu.vector_store %arg8[%c0_15, %c0_16], %20 {strides = array<i32>} : memref<128x128xf32, #tpu.memory_space<vmem>>, vector<128x128xf32>,
    return
  }
  func.func @transform_0(%arg0: i32) -> (i32, i32) {
    %c0_i32 = arith.constant 0 : i32
    %c0_i32_0 = arith.constant 0 : i32
    return %arg0, %c0_i32 : i32, i32
  }
  func.func @transform_1(%arg0: i32) -> (i32, i32) {
    %c0_i32 = arith.constant 0 : i32
    %c0_i32_0 = arith.constant 0 : i32
    %c0_i32_1 = arith.constant 0 : i32
    return %c0_i32, %c0_i32_0 : i32, i32
  }
  func.func @transform_2(%arg0: i32) -> (i32, i32) {
    %c0_i32 = arith.constant 0 : i32
    %c0_i32_0 = arith.constant 0 : i32
    %c0_i32_1 = arith.constant 0 : i32
    return %c0_i32, %c0_i32_0 : i32, i32
  }
  func.func @transform_3(%arg0: i32) -> (i32, i32) {
    %c0_i32 = arith.constant 0 : i32
    %c0_i32_0 = arith.constant 0 : i32
    %c0_i32_1 = arith.constant 0 : i32
    return %c0_i32, %c0_i32_0 : i32, i32
  }
  func.func @transform_4(%arg0: i32) -> (i32, i32) {
    %c0_i32 = arith.constant 0 : i32
    %c0_i32_0 = arith.constant 0 : i32
    %c0_i32_1 = arith.constant 0 : i32
    return %c0_i32, %c0_i32_0 : i32, i32
  }
  func.func @transform_5(%arg0: i32) -> (i32, i32) {
    %c0_i32 = arith.constant 0 : i32
    %c0_i32_0 = arith.constant 0 : i32
    %c0_i32_1 = arith.constant 0 : i32
    return %c0_i32, %c0_i32_0 : i32, i32
  }
  func.func @transform_6(%arg0: i32) -> (i32, i32) {
    %c0_i32 = arith.constant 0 : i32
    %c0_i32_0 = arith.constant 0 : i32
    %c0_i32_1 = arith.constant 0 : i32
    return %c0_i32, %c0_i32_0 : i32, i32
  }
  func.func @transform_7(%arg0: i32) -> (i32, i32) {
    %c0_i32 = arith.constant 0 : i32
    %c0_i32_0 = arith.constant 0 : i32
    return %arg0, %c0_i32 : i32, i32
  }
}

</mosaic_0001>

<llo_original>
// kernel: dnn_forward.1
$region0: #{dnn_forward.1}
  #allocation0 [shape = 'u32[]', space=smem, size = 0x4, offset = 0x4, fixed_abs, tag = 'smem constant byte address 0x4 - core index']
  #allocation1 [shape = 'u32[144,128]{1,0:T(1,128)}', space=vmem, size = 0x12000, scoped, tag = 'internal scratch']
  %s0 = inlined_call_operand.vmem [shape: f32[256,16], index: 0, kind: input, shape index: {}]
  %s1 = inlined_call_operand.vmem [shape: bf16[16,128], index: 1, kind: input, shape index: {}]
  %s2 = inlined_call_operand.vmem [shape: f32[1,128], index: 2, kind: input, shape index: {}]
  %s3 = inlined_call_operand.vmem [shape: bf16[128,128], index: 3, kind: input, shape index: {}]
  %s4 = inlined_call_operand.vmem [shape: f32[1,128], index: 4, kind: input, shape index: {}]
  %s5 = inlined_call_operand.vmem [shape: bf16[128,128], index: 5, kind: input, shape index: {}]
  %s6 = inlined_call_operand.vmem [shape: f32[1,128], index: 6, kind: input, shape index: {}]
  %s7 = inlined_call_operand.vmem [shape: f32[256,128], index: 7, kind: output, shape index: {}]
  %s8 = sld [smem:[#allocation0]]
  $region61: #{dnn_forward.1} parent=0
    _
  %s10 = ssub.s32 1, %s8
  %s11 = scalar_select 0, %s10, %s8
  loop: start=0, step=1, limit=4
  $region2: #{dnn_forward.1} parent=0 // loop_pre_header
    _
  $region3: #{dnn_forward.1} parent=0 // loop_header
    %s13 = sphi 0, %s17
    %p14 = scmp.ge.s32.totalorder %s13, 4
    %s23 = sphi 0, %s25
    %s26 = sphi 0, %s23
    %s27 = sphi 0, %s26
    %s43 = sphi 0, %s27
    %s47 = sphi 0, %s47
    %s49 = sphi 0, %s47
    %s50 = sphi 0, %s49
    %s64 = sphi 0, %s50
    %s68 = sphi 0, %s68
    %s70 = sphi 0, %s68
    %s71 = sphi 0, %s70
    %s85 = sphi 0, %s71
    %s89 = sphi 0, %s89
    %s91 = sphi 0, %s89
    %s92 = sphi 0, %s91
    %s106 = sphi 0, %s92
    %s110 = sphi 0, %s110
    %s112 = sphi 0, %s110
    %s113 = sphi 0, %s112
    %s127 = sphi 0, %s113
    %s131 = sphi 0, %s131
    %s133 = sphi 0, %s131
    %s134 = sphi 0, %s133
    %s148 = sphi 0, %s134
    %s152 = sphi 0, %s152
    %s154 = sphi 0, %s152
    %s155 = sphi 0, %s154
    %s169 = sphi 0, %s155
    %s175 = sphi 0, %s177
    %s178 = sphi 0, %s175
    %s179 = sphi 0, %s178
    %s195 = sphi 0, %s179
  $region4: #{dnn_forward.1} parent=0 // loop_header_branch
    %16 = sbr.rel (%p14) target = $region8
  $region5: #{dnn_forward.1} parent=0 // loop_body
    %s18 = ssub.s32 %s13, 1
    %s19 = ssub.s32 %s13, 2
    %s20 = sadd.s32 %s13, 1
    %s21 = ssub.s32 %s13, %s20
    %p22 = scmp.eq.s32.totalorder %s21, 0
    %s24 = sadd.s32 %s23, 1
    %s25 = scalar_select %p22, %s23, %s24
    %p28 = pneg %p22
    %p29 = scmp.eq.s32.totalorder %s13, 1
    %p30 = por %p28, %p29
    %p31 = scmp.ne.s32.totalorder %s23, %s26
    %p32 = scmp.eq.s32.totalorder %s13, 0
    %p33 = por %p31, %p32
    %p34 = scmp.ne.s32.totalorder %s23, %s26
    %p35 = scmp.eq.s32.totalorder %s18, 1
    %p36 = por %p34, %p35
    %p37 = scmp.ne.s32.totalorder %s26, %s27
    %p38 = scmp.eq.s32.totalorder %s18, 0
    %p39 = por %p37, %p38
    %p40 = scmp.ne.s32.totalorder %s26, %s27
    %p41 = scmp.eq.s32.totalorder %s19, 1
    %p42 = por %p40, %p41
    %p44 = scmp.ne.s32.totalorder %s27, %s43
    %p45 = scmp.eq.s32.totalorder %s19, 0
    %p46 = por %p44, %p45
    %s48 = sadd.s32 %s47, 1
    %p51 = scmp.eq.s32.totalorder %s13, 1
    %p52 = scmp.ne.s32.totalorder %s47, %s49
    %p53 = scmp.eq.s32.totalorder %s13, 0
    %p54 = por %p52, %p53
    %p55 = scmp.ne.s32.totalorder %s47, %s49
    %p56 = scmp.eq.s32.totalorder %s18, 1
    %p57 = por %p55, %p56
    %p58 = scmp.ne.s32.totalorder %s49, %s50
    %p59 = scmp.eq.s32.totalorder %s18, 0
    %p60 = por %p58, %p59
    %p61 = scmp.ne.s32.totalorder %s49, %s50
    %p62 = scmp.eq.s32.totalorder %s19, 1
    %p63 = por %p61, %p62
    %p65 = scmp.ne.s32.totalorder %s50, %s64
    %p66 = scmp.eq.s32.totalorder %s19, 0
    %p67 = por %p65, %p66
    %s69 = sadd.s32 %s68, 1
    %p72 = scmp.eq.s32.totalorder %s13, 1
    %p73 = scmp.ne.s32.totalorder %s68, %s70
    %p74 = scmp.eq.s32.totalorder %s13, 0
    %p75 = por %p73, %p74
    %p76 = scmp.ne.s32.totalorder %s68, %s70
    %p77 = scmp.eq.s32.totalorder %s18, 1
    %p78 = por %p76, %p77
    %p79 = scmp.ne.s32.totalorder %s70, %s71
    %p80 = scmp.eq.s32.totalorder %s18, 0
    %p81 = por %p79, %p80
    %p82 = scmp.ne.s32.totalorder %s70, %s71
    %p83 = scmp.eq.s32.totalorder %s19, 1
    %p84 = por %p82, %p83
    %p86 = scmp.ne.s32.totalorder %s71, %s85
    %p87 = scmp.eq.s32.totalorder %s19, 0
    %p88 = por %p86, %p87
    %s90 = sadd.s32 %s89, 1
    %p93 = scmp.eq.s32.totalorder %s13, 1
    %p94 = scmp.ne.s32.totalorder %s89, %s91
    %p95 = scmp.eq.s32.totalorder %s13, 0
    %p96 = por %p94, %p95
    %p97 = scmp.ne.s32.totalorder %s89, %s91
    %p98 = scmp.eq.s32.totalorder %s18, 1
    %p99 = por %p97, %p98
    %p100 = scmp.ne.s32.totalorder %s91, %s92
    %p101 = scmp.eq.s32.totalorder %s18, 0
    %p102 = por %p100, %p101
    %p103 = scmp.ne.s32.totalorder %s91, %s92
    %p104 = scmp.eq.s32.totalorder %s19, 1
    %p105 = por %p103, %p104
    %p107 = scmp.ne.s32.totalorder %s92, %s106
    %p108 = scmp.eq.s32.totalorder %s19, 0
    %p109 = por %p107, %p108
    %s111 = sadd.s32 %s110, 1
    %p114 = scmp.eq.s32.totalorder %s13, 1
    %p115 = scmp.ne.s32.totalorder %s110, %s112
    %p116 = scmp.eq.s32.totalorder %s13, 0
    %p117 = por %p115, %p116
    %p118 = scmp.ne.s32.totalorder %s110, %s112
    %p119 = scmp.eq.s32.totalorder %s18, 1
    %p120 = por %p118, %p119
    %p121 = scmp.ne.s32.totalorder %s112, %s113
    %p122 = scmp.eq.s32.totalorder %s18, 0
    %p123 = por %p121, %p122
    %p124 = scmp.ne.s32.totalorder %s112, %s113
    %p125 = scmp.eq.s32.totalorder %s19, 1
    %p126 = por %p124, %p125
    %p128 = scmp.ne.s32.totalorder %s113, %s127
    %p129 = scmp.eq.s32.totalorder %s19, 0
    %p130 = por %p128, %p129
    %s132 = sadd.s32 %s131, 1
    %p135 = scmp.eq.s32.totalorder %s13, 1
    %p136 = scmp.ne.s32.totalorder %s131, %s133
    %p137 = scmp.eq.s32.totalorder %s13, 0
    %p138 = por %p136, %p137
    %p139 = scmp.ne.s32.totalorder %s131, %s133
    %p140 = scmp.eq.s32.totalorder %s18, 1
    %p141 = por %p139, %p140
    %p142 = scmp.ne.s32.totalorder %s133, %s134
    %p143 = scmp.eq.s32.totalorder %s18, 0
    %p144 = por %p142, %p143
    %p145 = scmp.ne.s32.totalorder %s133, %s134
    %p146 = scmp.eq.s32.totalorder %s19, 1
    %p147 = por %p145, %p146
    %p149 = scmp.ne.s32.totalorder %s134, %s148
    %p150 = scmp.eq.s32.totalorder %s19, 0
    %p151 = por %p149, %p150
    %s153 = sadd.s32 %s152, 1
    %p156 = scmp.eq.s32.totalorder %s13, 1
    %p157 = scmp.ne.s32.totalorder %s152, %s154
    %p158 = scmp.eq.s32.totalorder %s13, 0
    %p159 = por %p157, %p158
    %p160 = scmp.ne.s32.totalorder %s152, %s154
    %p161 = scmp.eq.s32.totalorder %s18, 1
    %p162 = por %p160, %p161
    %p163 = scmp.ne.s32.totalorder %s154, %s155
    %p164 = scmp.eq.s32.totalorder %s18, 0
    %p165 = por %p163, %p164
    %p166 = scmp.ne.s32.totalorder %s154, %s155
    %p167 = scmp.eq.s32.totalorder %s19, 1
    %p168 = por %p166, %p167
    %p170 = scmp.ne.s32.totalorder %s155, %s169
    %p171 = scmp.eq.s32.totalorder %s19, 0
    %p172 = por %p170, %p171
    %s173 = ssub.s32 %s13, %s20
    %p174 = scmp.eq.s32.totalorder %s173, 0
    %s176 = sadd.s32 %s175, 1
    %s177 = scalar_select %p174, %s175, %s176
    %p180 = pneg %p174
    %p181 = scmp.eq.s32.totalorder %s13, 1
    %p182 = por %p180, %p181
    %p183 = scmp.ne.s32.totalorder %s175, %s178
    %p184 = scmp.eq.s32.totalorder %s13, 0
    %p185 = por %p183, %p184
    %p186 = scmp.ne.s32.totalorder %s175, %s178
    %p187 = scmp.eq.s32.totalorder %s18, 1
    %p188 = por %p186, %p187
    %p189 = scmp.ne.s32.totalorder %s178, %s179
    %p190 = scmp.eq.s32.totalorder %s18, 0
    %p191 = por %p189, %p190
    %p192 = scmp.ne.s32.totalorder %s178, %s179
    %p193 = scmp.eq.s32.totalorder %s19, 1
    %p194 = por %p192, %p193
    %p196 = scmp.ne.s32.totalorder %s179, %s195
    %p197 = scmp.eq.s32.totalorder %s19, 0
    %p198 = por %p196, %p197
    %p199 = scmp.le.s32.totalorder 1, %s13
    %p200 = scmp.lt.s32.totalorder %s13, 3
    %p201 = pnand %p199, %p200
    %p202 = pneg %p201
    // Predicated region
    $region9: #{dnn_forward.1} parent=5 // pred_check
      _
    $region10: #{dnn_forward.1} parent=5 // pred_check_branch
      %204 = sbr.rel (%p201) target = $region12
    $region11: #{dnn_forward.1} parent=5 // pred_region
      %s205 = ssub.s32 %s13, 1
      // Predicated region
      $region13: #{dnn_forward.1} parent=11 // pred_check
        %p206 = pneg %p60
      $region14: #{dnn_forward.1} parent=11 // pred_check_branch
        %208 = sbr.rel (%p206) target = $region16
      $region15: #{dnn_forward.1} parent=11 // pred_region
        _
      $region16: #{dnn_forward.1} parent=11 // pred_fallthru
        _
      // Predicated region
      $region17: #{dnn_forward.1} parent=11 // pred_check
        %p209 = pneg %p81
      $region18: #{dnn_forward.1} parent=11 // pred_check_branch
        %211 = sbr.rel (%p209) target = $region20
      $region19: #{dnn_forward.1} parent=11 // pred_region
        _
      $region20: #{dnn_forward.1} parent=11 // pred_fallthru
        _
      // Predicated region
      $region21: #{dnn_forward.1} parent=11 // pred_check
        %p212 = pneg %p102
      $region22: #{dnn_forward.1} parent=11 // pred_check_branch
        %214 = sbr.rel (%p212) target = $region24
      $region23: #{dnn_forward.1} parent=11 // pred_region
        _
      $region24: #{dnn_forward.1} parent=11 // pred_fallthru
        _
      // Predicated region
      $region25: #{dnn_forward.1} parent=11 // pred_check
        %p215 = pneg %p123
      $region26: #{dnn_forward.1} parent=11 // pred_check_branch
        %217 = sbr.rel (%p215) target = $region28
      $region27: #{dnn_forward.1} parent=11 // pred_region
        _
      $region28: #{dnn_forward.1} parent=11 // pred_fallthru
        _
      // Predicated region
      $region29: #{dnn_forward.1} parent=11 // pred_check
        %p218 = pneg %p144
      $region30: #{dnn_forward.1} parent=11 // pred_check_branch
        %220 = sbr.rel (%p218) target = $region32
      $region31: #{dnn_forward.1} parent=11 // pred_region
        _
      $region32: #{dnn_forward.1} parent=11 // pred_fallthru
        _
      // Predicated region
      $region33: #{dnn_forward.1} parent=11 // pred_check
        %p221 = pneg %p165
      $region34: #{dnn_forward.1} parent=11 // pred_check_branch
        %223 = sbr.rel (%p221) target = $region36
      $region35: #{dnn_forward.1} parent=11 // pred_region
        _
      $region36: #{dnn_forward.1} parent=11 // pred_fallthru
        _
    $region12: #{dnn_forward.1} parent=5 // pred_fallthru
      _
    %p224 = scmp.lt.s32.totalorder %s13, 2
    // Predicated region
    $region37: #{dnn_forward.1} parent=5 // pred_check
      %p225 = pneg %p224
    $region38: #{dnn_forward.1} parent=5 // pred_check_branch
      %227 = sbr.rel (%p225) target = $region40
    $region39: #{dnn_forward.1} parent=5 // pred_region
      // Predicated region
      $region41: #{dnn_forward.1} parent=39 // pred_check
        %p228 = pneg %p33
      $region42: #{dnn_forward.1} parent=39 // pred_check_branch
        %230 = sbr.rel (%p228) target = $region44
      $region43: #{dnn_forward.1} parent=39 // pred_region
        %s231 = smul.u32 16, %s13
        %p232 = scmp.lt.s32.totalorder %s231, 31
        %s233 = scalar_select %p232, %s231, 31
        %s234 = smul.addr %s233, 8
        %s235 = scalar_lea.vmem %s0, %s234
        %s236 = smul.u32 16, %s13
      $region44: #{dnn_forward.1} parent=39 // pred_fallthru
        _
    $region40: #{dnn_forward.1} parent=5 // pred_fallthru
      _
    %p237 = scmp.le.s32.totalorder 1, %s13
    %p238 = scmp.lt.s32.totalorder %s13, 3
    %p239 = pnand %p237, %p238
    %p240 = pneg %p239
    // Predicated region
    $region45: #{dnn_forward.1} parent=5 // pred_check
      _
    $region46: #{dnn_forward.1} parent=5 // pred_check_branch
      %242 = sbr.rel (%p239) target = $region48
    $region47: #{dnn_forward.1} parent=5 // pred_region
      %s243 = ssub.s32 %s13, 1
      %s244 = smul.u32 16, %s18
      %p245 = scmp.lt.s32.totalorder %s244, 31
      %s246 = scalar_select %p245, %s244, 31
      %s247 = smul.addr %s246, 8
      %s248 = scalar_lea.vmem %s0, %s247
      %p249 = pneg %p39
      %p250 = pneg %p36
      %p251 = pneg %p60
      %p252 = pneg %p57
      %p253 = pneg %p81
      %p254 = pneg %p78
      %p255 = pneg %p102
      %p256 = pneg %p99
      %p257 = pneg %p123
      %p258 = pneg %p120
      %p259 = pneg %p144
      %p260 = pneg %p141
      %p261 = pneg %p165
      %p262 = pneg %p162
      %p263 = pneg %p191
      %p264 = pneg %p188
      %s265 = smul.u32 16, %s18
      %p266 = scmp.lt.s32.totalorder %s265, 31
      %s267 = scalar_select %p266, %s265, 31
      %s268 = smul.addr %s267, 8
      %s269 = scalar_lea.vmem %s7, %s268
      %s270 = smul.u32 16, %s18
      %p271 = scmp.lt.s32.totalorder %s270, 31
      %s272 = scalar_select %p271, %s270, 31
      %s273 = smul.addr %s272, 8
      %s274 = scalar_lea.vmem %s0, %s273
      %s275 = smul.u32 16, %s18
      %s276 = smul.u32 16, %s18
      %p277 = scmp.lt.s32.totalorder %s276, 31
      %s278 = scalar_select %p277, %s276, 31
      %s279 = smul.addr %s278, 8
      %s280 = scalar_lea.vmem %s7, %s279
      %s281 = smul.u32 16, %s18
      %v283 = vld [vmem:[%s274] sm:$0xff]
      %v284 = vld [vmem:[%s274 + $0x8] sm:$0xff]
      %v285 = vld [vmem:[%s274 + $0x10] sm:$0xff]
      %v286 = vld [vmem:[%s274 + $0x18] sm:$0xff]
      %v287 = vld [vmem:[%s274 + $0x20] sm:$0xff]
      %v288 = vld [vmem:[%s274 + $0x28] sm:$0xff]
      %v289 = vld [vmem:[%s274 + $0x30] sm:$0xff]
      %v290 = vld [vmem:[%s274 + $0x38] sm:$0xff]
      %v291 = vld [vmem:[%s274 + $0x40] sm:$0xff]
      %v292 = vld [vmem:[%s274 + $0x48] sm:$0xff]
      %v293 = vld [vmem:[%s274 + $0x50] sm:$0xff]
      %v294 = vld [vmem:[%s274 + $0x58] sm:$0xff]
      %v295 = vld [vmem:[%s274 + $0x60] sm:$0xff]
      %v296 = vld [vmem:[%s274 + $0x68] sm:$0xff]
      %v297 = vld [vmem:[%s274 + $0x70] sm:$0xff]
      %v298 = vld [vmem:[%s274 + $0x78] sm:$0xff]
      %v299 = vld [vmem:[%s1] sm:$0xf]
      %v300 = vld [vmem:[%s1 + $0x4] sm:$0xf]
      %v301 = vld [vmem:[%s2] sm:$0x1]
      %v302 = vpack.c.bf16 %v284, %v283
      %v303 = vpack.c.bf16 %v286, %v285
      %v304 = vpack.c.bf16 %v288, %v287
      %v305 = vpack.c.bf16 %v290, %v289
      %v306 = vpack.c.bf16 %v292, %v291
      %v307 = vpack.c.bf16 %v294, %v293
      %v308 = vpack.c.bf16 %v296, %v295
      %v309 = vpack.c.bf16 %v298, %v297
      %v311 = vlaneseq
      %v312 = vshrl.u32 %v311, 7
      %v313 = vsub.s32 0, %v312
      %v314 = vrot.slane %v301, %v313
      %v318 = vunpack.c.l.b16 %v299
      %v319 = vunpack.c.l.b16 %v300
      %v320 = vpack.c.b16 %v319, %v318
      %vm322 = vcmask 130048
      %v324 = vsel %vm322, %v302, 0
      %v327 = vsel %vm322, %v303, 0
      %v330 = vsel %vm322, %v304, 0
      %v333 = vsel %vm322, %v305, 0
      %v336 = vsel %vm322, %v306, 0
      %v339 = vsel %vm322, %v307, 0
      %v342 = vsel %vm322, %v308, 0
      %v345 = vsel %vm322, %v309, 0
      %347 = vmatprep.subr.bf16.mxu0 0
      %348 = vmatpush1.bf16.msra.mxu0 %v320
      %349 = vmatprep.subr.bf16.mxu0 0
      %350 = vmatpush1.bf16.msra.mxu0 0
      %351 = vmatprep.subr.bf16.mxu0 0
      %352 = vmatpush1.bf16.msra.mxu0 0
      %353 = vmatprep.subr.bf16.mxu0 0
      %354 = vmatpush1.bf16.msra.mxu0 0
      %355 = vmatprep.subr.bf16.mxu0 0
      %356 = vmatpush1.bf16.msra.mxu0 0
      %357 = vmatprep.subr.bf16.mxu0 0
      %358 = vmatpush1.bf16.msra.mxu0 0
      %359 = vmatprep.subr.bf16.mxu0 0
      %360 = vmatpush1.bf16.msra.mxu0 0
      %361 = vmatprep.subr.bf16.mxu0 0
      %362 = vmatpush1.bf16.msra.mxu0 0
      %363 = vmatprep.subr.bf16.mxu0 0
      %364 = vmatpush1.bf16.msra.mxu0 0
      %365 = vmatprep.subr.bf16.mxu0 0
      %366 = vmatpush1.bf16.msra.mxu0 0
      %367 = vmatprep.subr.bf16.mxu0 0
      %368 = vmatpush1.bf16.msra.mxu0 0
      %369 = vmatprep.subr.bf16.mxu0 0
      %370 = vmatpush1.bf16.msra.mxu0 0
      %371 = vmatprep.subr.bf16.mxu0 0
      %372 = vmatpush1.bf16.msra.mxu0 0
      %373 = vmatprep.subr.bf16.mxu0 0
      %374 = vmatpush1.bf16.msra.mxu0 0
      %375 = vmatprep.subr.bf16.mxu0 0
      %376 = vmatpush1.bf16.msra.mxu0 0
      %377 = vmatprep.subr.bf16.mxu0 0
      %378 = vmatpush1.bf16.msra.mxu0 0
      %379 = vmatprep.mubr.bf16.mxu0 0
      %380 = vmatmul.mubr.bf16.gmra.mrb[0].mxu0 %v324
      %v381 = vpop.f32.mrb[0].mxu0
      %v382 = vadd.f32 %v314, %v381
      %v383 = vpop.f32.mrb[0].mxu0
      %v384 = vpop.f32.mrb[0].mxu0
      %v385 = vadd.f32 %v314, %v384
      %v386 = vpop.f32.mrb[0].mxu0
      %387 = vmatprep.mubr.bf16.mxu0 0
      %388 = vmatmul.mubr.bf16.gmra.mrb[0].mxu0 %v327
      %v389 = vpop.f32.mrb[0].mxu0
      %v390 = vadd.f32 %v314, %v389
      %v391 = vpop.f32.mrb[0].mxu0
      %v392 = vpop.f32.mrb[0].mxu0
      %v393 = vadd.f32 %v314, %v392
      %v394 = vpop.f32.mrb[0].mxu0
      %395 = vmatprep.mubr.bf16.mxu0 0
      %396 = vmatmul.mubr.bf16.gmra.mrb[0].mxu0 %v330
      %v397 = vpop.f32.mrb[0].mxu0
      %v398 = vadd.f32 %v314, %v397
      %v399 = vpop.f32.mrb[0].mxu0
      %v400 = vpop.f32.mrb[0].mxu0
      %v401 = vadd.f32 %v314, %v400
      %v402 = vpop.f32.mrb[0].mxu0
      %403 = vmatprep.mubr.bf16.mxu0 0
      %404 = vmatmul.mubr.bf16.gmra.mrb[0].mxu0 %v333
      %v405 = vpop.f32.mrb[0].mxu0
      %v406 = vadd.f32 %v314, %v405
      %v407 = vpop.f32.mrb[0].mxu0
      %v408 = vpop.f32.mrb[0].mxu0
      %v409 = vadd.f32 %v314, %v408
      %v410 = vpop.f32.mrb[0].mxu0
      %411 = vmatprep.mubr.bf16.mxu0 0
      %412 = vmatmul.mubr.bf16.gmra.mrb[0].mxu0 %v336
      %v413 = vpop.f32.mrb[0].mxu0
      %v414 = vadd.f32 %v314, %v413
      %v415 = vpop.f32.mrb[0].mxu0
      %v416 = vpop.f32.mrb[0].mxu0
      %v417 = vadd.f32 %v314, %v416
      %v418 = vpop.f32.mrb[0].mxu0
      %419 = vmatprep.mubr.bf16.mxu0 0
      %420 = vmatmul.mubr.bf16.gmra.mrb[0].mxu0 %v339
      %v421 = vpop.f32.mrb[0].mxu0
      %v422 = vadd.f32 %v314, %v421
      %v423 = vpop.f32.mrb[0].mxu0
      %v424 = vpop.f32.mrb[0].mxu0
      %v425 = vadd.f32 %v314, %v424
      %v426 = vpop.f32.mrb[0].mxu0
      %427 = vmatprep.mubr.bf16.mxu0 0
      %428 = vmatmul.mubr.bf16.gmra.mrb[0].mxu0 %v342
      %v429 = vpop.f32.mrb[0].mxu0
      %v430 = vadd.f32 %v314, %v429
      %v431 = vpop.f32.mrb[0].mxu0
      %v432 = vpop.f32.mrb[0].mxu0
      %v433 = vadd.f32 %v314, %v432
      %v434 = vpop.f32.mrb[0].mxu0
      %435 = vmatprep.mubr.bf16.mxu0 0
      %436 = vmatmul.mubr.bf16.gmra.mrb[0].mxu0 %v345
      %v437 = vpop.f32.mrb[0].mxu0
      %v438 = vadd.f32 %v314, %v437
      %v439 = vpop.f32.mrb[0].mxu0
      %v440 = vpop.f32.mrb[0].mxu0
      %v441 = vadd.f32 %v314, %v440
      %v442 = vpop.f32.mrb[0].mxu0
      %443 = vdwg.mxu0
      %v444 = vtanh.pop %v382
      %v445 = vtanh.pop %v385
      %v446 = vtanh.pop %v390
      %v447 = vtanh.pop %v393
      %v448 = vtanh.pop %v398
      %v449 = vtanh.pop %v401
      %v450 = vtanh.pop %v406
      %v451 = vtanh.pop %v409
      %v452 = vtanh.pop %v414
      %v453 = vtanh.pop %v417
      %v454 = vtanh.pop %v422
      %v455 = vtanh.pop %v425
      %v456 = vtanh.pop %v430
      %v457 = vtanh.pop %v433
      %v458 = vtanh.pop %v438
      %v459 = vtanh.pop %v441
      %v460 = vld [vmem:[%s3] sm:$0xf]
      %v461 = vld [vmem:[%s3 + $0x4] sm:$0xf]
      %v462 = vld [vmem:[%s3 + $0x8] sm:$0xf]
      %v463 = vld [vmem:[%s3 + $0xc] sm:$0xf]
      %v464 = vld [vmem:[%s3 + $0x10] sm:$0xf]
      %v465 = vld [vmem:[%s3 + $0x14] sm:$0xf]
      %v466 = vld [vmem:[%s3 + $0x18] sm:$0xf]
      %v467 = vld [vmem:[%s3 + $0x1c] sm:$0xf]
      %v468 = vld [vmem:[%s3 + $0x20] sm:$0xf]
      %v469 = vld [vmem:[%s3 + $0x24] sm:$0xf]
      %v470 = vld [vmem:[%s3 + $0x28] sm:$0xf]
      %v471 = vld [vmem:[%s3 + $0x2c] sm:$0xf]
      %v472 = vld [vmem:[%s3 + $0x30] sm:$0xf]
      %v473 = vld [vmem:[%s3 + $0x34] sm:$0xf]
      %v474 = vld [vmem:[%s3 + $0x38] sm:$0xf]
      %v475 = vld [vmem:[%s3 + $0x3c] sm:$0xf]
      %v476 = vld [vmem:[%s4] sm:$0x1]
      %v477 = vpack.c.bf16 %v445, %v444
      %v478 = vpack.c.bf16 %v447, %v446
      %v479 = vpack.c.bf16 %v449, %v448
      %v480 = vpack.c.bf16 %v451, %v450
      %v481 = vpack.c.bf16 %v453, %v452
      %v482 = vpack.c.bf16 %v455, %v454
      %v483 = vpack.c.bf16 %v457, %v456
      %v484 = vpack.c.bf16 %v459, %v458
      %v486 = vlaneseq
      %v487 = vshrl.u32 %v486, 7
      %v488 = vsub.s32 0, %v487
      %v489 = vrot.slane %v476, %v488
      %v507 = vunpack.c.l.b16 %v460
      %v508 = vunpack.c.l.b16 %v461
      %v509 = vunpack.c.l.b16 %v462
      %v510 = vunpack.c.l.b16 %v463
      %v511 = vunpack.c.l.b16 %v464
      %v512 = vunpack.c.l.b16 %v465
      %v513 = vunpack.c.l.b16 %v466
      %v514 = vunpack.c.l.b16 %v467
      %v515 = vunpack.c.l.b16 %v468
      %v516 = vunpack.c.l.b16 %v469
      %v517 = vunpack.c.l.b16 %v470
      %v518 = vunpack.c.l.b16 %v471
      %v519 = vunpack.c.l.b16 %v472
      %v520 = vunpack.c.l.b16 %v473
      %v521 = vunpack.c.l.b16 %v474
      %v522 = vunpack.c.l.b16 %v475
      %v523 = vpack.c.b16 %v508, %v507
      %v524 = vpack.c.b16 %v510, %v509
      %v525 = vpack.c.b16 %v512, %v511
      %v526 = vpack.c.b16 %v514, %v513
      %v527 = vpack.c.b16 %v516, %v515
      %v528 = vpack.c.b16 %v518, %v517
      %v529 = vpack.c.b16 %v520, %v519
      %v530 = vpack.c.b16 %v522, %v521
      %539 = vmatprep.subr.bf16.mxu0 0
      %540 = vmatpush1.bf16.msra.mxu0 %v523
      %541 = vmatprep.subr.bf16.mxu0 0
      %542 = vmatpush1.bf16.msra.mxu0 %v524
      %543 = vmatprep.subr.bf16.mxu0 0
      %544 = vmatpush1.bf16.msra.mxu0 %v525
      %545 = vmatprep.subr.bf16.mxu0 0
      %546 = vmatpush1.bf16.msra.mxu0 %v526
      %547 = vmatprep.subr.bf16.mxu0 0
      %548 = vmatpush1.bf16.msra.mxu0 %v527
      %549 = vmatprep.subr.bf16.mxu0 0
      %550 = vmatpush1.bf16.msra.mxu0 %v528
      %551 = vmatprep.subr.bf16.mxu0 0
      %552 = vmatpush1.bf16.msra.mxu0 %v529
      %553 = vmatprep.subr.bf16.mxu0 0
      %554 = vmatpush1.bf16.msra.mxu0 %v530
      %555 = vmatprep.subr.bf16.mxu0 0
      %556 = vmatpush1.bf16.msra.mxu0 0
      %557 = vmatprep.subr.bf16.mxu0 0
      %558 = vmatpush1.bf16.msra.mxu0 0
      %559 = vmatprep.subr.bf16.mxu0 0
      %560 = vmatpush1.bf16.msra.mxu0 0
      %561 = vmatprep.subr.bf16.mxu0 0
      %562 = vmatpush1.bf16.msra.mxu0 0
      %563 = vmatprep.subr.bf16.mxu0 0
      %564 = vmatpush1.bf16.msra.mxu0 0
      %565 = vmatprep.subr.bf16.mxu0 0
      %566 = vmatpush1.bf16.msra.mxu0 0
      %567 = vmatprep.subr.bf16.mxu0 0
      %568 = vmatpush1.bf16.msra.mxu0 0
      %569 = vmatprep.subr.bf16.mxu0 0
      %570 = vmatpush1.bf16.msra.mxu0 0
      %571 = vmatprep.mubr.bf16.mxu0 0
      %572 = vmatmul.mubr.bf16.gmra.mrb[0].mxu0 %v477
      %v573 = vpop.f32.mrb[0].mxu0
      %v574 = vadd.f32 %v489, %v573
      %v575 = vpop.f32.mrb[0].mxu0
      %v576 = vpop.f32.mrb[0].mxu0
      %v577 = vadd.f32 %v489, %v576
      %v578 = vpop.f32.mrb[0].mxu0
      %579 = vmatprep.mubr.bf16.mxu0 0
      %580 = vmatmul.mubr.bf16.gmra.mrb[0].mxu0 %v478
      %v581 = vpop.f32.mrb[0].mxu0
      %v582 = vadd.f32 %v489, %v581
      %v583 = vpop.f32.mrb[0].mxu0
      %v584 = vpop.f32.mrb[0].mxu0
      %v585 = vadd.f32 %v489, %v584
      %v586 = vpop.f32.mrb[0].mxu0
      %587 = vmatprep.mubr.bf16.mxu0 0
      %588 = vmatmul.mubr.bf16.gmra.mrb[0].mxu0 %v479
      %v589 = vpop.f32.mrb[0].mxu0
      %v590 = vadd.f32 %v489, %v589
      %v591 = vpop.f32.mrb[0].mxu0
      %v592 = vpop.f32.mrb[0].mxu0
      %v593 = vadd.f32 %v489, %v592
      %v594 = vpop.f32.mrb[0].mxu0
      %595 = vmatprep.mubr.bf16.mxu0 0
      %596 = vmatmul.mubr.bf16.gmra.mrb[0].mxu0 %v480
      %v597 = vpop.f32.mrb[0].mxu0
      %v598 = vadd.f32 %v489, %v597
      %v599 = vpop.f32.mrb[0].mxu0
      %v600 = vpop.f32.mrb[0].mxu0
      %v601 = vadd.f32 %v489, %v600
      %v602 = vpop.f32.mrb[0].mxu0
      %603 = vmatprep.mubr.bf16.mxu0 0
      %604 = vmatmul.mubr.bf16.gmra.mrb[0].mxu0 %v481
      %v605 = vpop.f32.mrb[0].mxu0
      %v606 = vadd.f32 %v489, %v605
      %v607 = vpop.f32.mrb[0].mxu0
      %v608 = vpop.f32.mrb[0].mxu0
      %v609 = vadd.f32 %v489, %v608
      %v610 = vpop.f32.mrb[0].mxu0
      %611 = vmatprep.mubr.bf16.mxu0 0
      %612 = vmatmul.mubr.bf16.gmra.mrb[0].mxu0 %v482
      %v613 = vpop.f32.mrb[0].mxu0
      %v614 = vadd.f32 %v489, %v613
      %v615 = vpop.f32.mrb[0].mxu0
      %v616 = vpop.f32.mrb[0].mxu0
      %v617 = vadd.f32 %v489, %v616
      %v618 = vpop.f32.mrb[0].mxu0
      %619 = vmatprep.mubr.bf16.mxu0 0
      %620 = vmatmul.mubr.bf16.gmra.mrb[0].mxu0 %v483
      %v621 = vpop.f32.mrb[0].mxu0
      %v622 = vadd.f32 %v489, %v621
      %v623 = vpop.f32.mrb[0].mxu0
      %v624 = vpop.f32.mrb[0].mxu0
      %v625 = vadd.f32 %v489, %v624
      %v626 = vpop.f32.mrb[0].mxu0
      %627 = vmatprep.mubr.bf16.mxu0 0
      %628 = vmatmul.mubr.bf16.gmra.mrb[0].mxu0 %v484
      %v629 = vpop.f32.mrb[0].mxu0
      %v630 = vadd.f32 %v489, %v629
      %v631 = vpop.f32.mrb[0].mxu0
      %v632 = vpop.f32.mrb[0].mxu0
      %v633 = vadd.f32 %v489, %v632
      %v634 = vpop.f32.mrb[0].mxu0
      %635 = vdwg.mxu0
      %v636 = vtanh.pop %v574
      %v637 = vtanh.pop %v577
      %v638 = vtanh.pop %v582
      %v639 = vtanh.pop %v585
      %v640 = vtanh.pop %v590
      %v641 = vtanh.pop %v593
      %v642 = vtanh.pop %v598
      %v643 = vtanh.pop %v601
      %v644 = vtanh.pop %v606
      %v645 = vtanh.pop %v609
      %v646 = vtanh.pop %v614
      %v647 = vtanh.pop %v617
      %v648 = vtanh.pop %v622
      %v649 = vtanh.pop %v625
      %v650 = vtanh.pop %v630
      %v651 = vtanh.pop %v633
      %v652 = vld [vmem:[%s5] sm:$0xf]
      %v653 = vld [vmem:[%s5 + $0x4] sm:$0xf]
      %v654 = vld [vmem:[%s5 + $0x8] sm:$0xf]
      %v655 = vld [vmem:[%s5 + $0xc] sm:$0xf]
      %v656 = vld [vmem:[%s5 + $0x10] sm:$0xf]
      %v657 = vld [vmem:[%s5 + $0x14] sm:$0xf]
      %v658 = vld [vmem:[%s5 + $0x18] sm:$0xf]
      %v659 = vld [vmem:[%s5 + $0x1c] sm:$0xf]
      %v660 = vld [vmem:[%s5 + $0x20] sm:$0xf]
      %v661 = vld [vmem:[%s5 + $0x24] sm:$0xf]
      %v662 = vld [vmem:[%s5 + $0x28] sm:$0xf]
      %v663 = vld [vmem:[%s5 + $0x2c] sm:$0xf]
      %v664 = vld [vmem:[%s5 + $0x30] sm:$0xf]
      %v665 = vld [vmem:[%s5 + $0x34] sm:$0xf]
      %v666 = vld [vmem:[%s5 + $0x38] sm:$0xf]
      %v667 = vld [vmem:[%s5 + $0x3c] sm:$0xf]
      %v668 = vld [vmem:[%s6] sm:$0x1]
      %v669 = vpack.c.bf16 %v637, %v636
      %v670 = vpack.c.bf16 %v639, %v638
      %v671 = vpack.c.bf16 %v641, %v640
      %v672 = vpack.c.bf16 %v643, %v642
      %v673 = vpack.c.bf16 %v645, %v644
      %v674 = vpack.c.bf16 %v647, %v646
      %v675 = vpack.c.bf16 %v649, %v648
      %v676 = vpack.c.bf16 %v651, %v650
      %v678 = vlaneseq
      %v679 = vshrl.u32 %v678, 7
      %v680 = vsub.s32 0, %v679
      %v681 = vrot.slane %v668, %v680
      %v699 = vunpack.c.l.b16 %v652
      %v700 = vunpack.c.l.b16 %v653
      %v701 = vunpack.c.l.b16 %v654
      %v702 = vunpack.c.l.b16 %v655
      %v703 = vunpack.c.l.b16 %v656
      %v704 = vunpack.c.l.b16 %v657
      %v705 = vunpack.c.l.b16 %v658
      %v706 = vunpack.c.l.b16 %v659
      %v707 = vunpack.c.l.b16 %v660
      %v708 = vunpack.c.l.b16 %v661
      %v709 = vunpack.c.l.b16 %v662
      %v710 = vunpack.c.l.b16 %v663
      %v711 = vunpack.c.l.b16 %v664
      %v712 = vunpack.c.l.b16 %v665
      %v713 = vunpack.c.l.b16 %v666
      %v714 = vunpack.c.l.b16 %v667
      %v715 = vpack.c.b16 %v700, %v699
      %v716 = vpack.c.b16 %v702, %v701
      %v717 = vpack.c.b16 %v704, %v703
      %v718 = vpack.c.b16 %v706, %v705
      %v719 = vpack.c.b16 %v708, %v707
      %v720 = vpack.c.b16 %v710, %v709
      %v721 = vpack.c.b16 %v712, %v711
      %v722 = vpack.c.b16 %v714, %v713
      %731 = vmatprep.subr.bf16.mxu0 0
      %732 = vmatpush1.bf16.msra.mxu0 %v715
      %733 = vmatprep.subr.bf16.mxu0 0
      %734 = vmatpush1.bf16.msra.mxu0 %v716
      %735 = vmatprep.subr.bf16.mxu0 0
      %736 = vmatpush1.bf16.msra.mxu0 %v717
      %737 = vmatprep.subr.bf16.mxu0 0
      %738 = vmatpush1.bf16.msra.mxu0 %v718
      %739 = vmatprep.subr.bf16.mxu0 0
      %740 = vmatpush1.bf16.msra.mxu0 %v719
      %741 = vmatprep.subr.bf16.mxu0 0
      %742 = vmatpush1.bf16.msra.mxu0 %v720
      %743 = vmatprep.subr.bf16.mxu0 0
      %744 = vmatpush1.bf16.msra.mxu0 %v721
      %745 = vmatprep.subr.bf16.mxu0 0
      %746 = vmatpush1.bf16.msra.mxu0 %v722
      %747 = vmatprep.subr.bf16.mxu0 0
      %748 = vmatpush1.bf16.msra.mxu0 0
      %749 = vmatprep.subr.bf16.mxu0 0
      %750 = vmatpush1.bf16.msra.mxu0 0
      %751 = vmatprep.subr.bf16.mxu0 0
      %752 = vmatpush1.bf16.msra.mxu0 0
      %753 = vmatprep.subr.bf16.mxu0 0
      %754 = vmatpush1.bf16.msra.mxu0 0
      %755 = vmatprep.subr.bf16.mxu0 0
      %756 = vmatpush1.bf16.msra.mxu0 0
      %757 = vmatprep.subr.bf16.mxu0 0
      %758 = vmatpush1.bf16.msra.mxu0 0
      %759 = vmatprep.subr.bf16.mxu0 0
      %760 = vmatpush1.bf16.msra.mxu0 0
      %761 = vmatprep.subr.bf16.mxu0 0
      %762 = vmatpush1.bf16.msra.mxu0 0
      %763 = vmatprep.mubr.bf16.mxu0 0
      %764 = vmatmul.mubr.bf16.gmra.mrb[0].mxu0 %v669
      %v765 = vpop.f32.mrb[0].mxu0
      %v766 = vadd.f32 %v681, %v765
      %v767 = vpop.f32.mrb[0].mxu0
      %v768 = vpop.f32.mrb[0].mxu0
      %v769 = vadd.f32 %v681, %v768
      %v770 = vpop.f32.mrb[0].mxu0
      %771 = vmatprep.mubr.bf16.mxu0 0
      %772 = vmatmul.mubr.bf16.gmra.mrb[0].mxu0 %v670
      %v773 = vpop.f32.mrb[0].mxu0
      %v774 = vadd.f32 %v681, %v773
      %v775 = vpop.f32.mrb[0].mxu0
      %v776 = vpop.f32.mrb[0].mxu0
      %v777 = vadd.f32 %v681, %v776
      %v778 = vpop.f32.mrb[0].mxu0
      %779 = vmatprep.mubr.bf16.mxu0 0
      %780 = vmatmul.mubr.bf16.gmra.mrb[0].mxu0 %v671
      %v781 = vpop.f32.mrb[0].mxu0
      %v782 = vadd.f32 %v681, %v781
      %v783 = vpop.f32.mrb[0].mxu0
      %v784 = vpop.f32.mrb[0].mxu0
      %v785 = vadd.f32 %v681, %v784
      %v786 = vpop.f32.mrb[0].mxu0
      %787 = vmatprep.mubr.bf16.mxu0 0
      %788 = vmatmul.mubr.bf16.gmra.mrb[0].mxu0 %v672
      %v789 = vpop.f32.mrb[0].mxu0
      %v790 = vadd.f32 %v681, %v789
      %v791 = vpop.f32.mrb[0].mxu0
      %v792 = vpop.f32.mrb[0].mxu0
      %v793 = vadd.f32 %v681, %v792
      %v794 = vpop.f32.mrb[0].mxu0
      %795 = vmatprep.mubr.bf16.mxu0 0
      %796 = vmatmul.mubr.bf16.gmra.mrb[0].mxu0 %v673
      %v797 = vpop.f32.mrb[0].mxu0
      %v798 = vadd.f32 %v681, %v797
      %v799 = vpop.f32.mrb[0].mxu0
      %v800 = vpop.f32.mrb[0].mxu0
      %v801 = vadd.f32 %v681, %v800
      %v802 = vpop.f32.mrb[0].mxu0
      %803 = vmatprep.mubr.bf16.mxu0 0
      %804 = vmatmul.mubr.bf16.gmra.mrb[0].mxu0 %v674
      %v805 = vpop.f32.mrb[0].mxu0
      %v806 = vadd.f32 %v681, %v805
      %v807 = vpop.f32.mrb[0].mxu0
      %v808 = vpop.f32.mrb[0].mxu0
      %v809 = vadd.f32 %v681, %v808
      %v810 = vpop.f32.mrb[0].mxu0
      %811 = vmatprep.mubr.bf16.mxu0 0
      %812 = vmatmul.mubr.bf16.gmra.mrb[0].mxu0 %v675
      %v813 = vpop.f32.mrb[0].mxu0
      %v814 = vadd.f32 %v681, %v813
      %v815 = vpop.f32.mrb[0].mxu0
      %v816 = vpop.f32.mrb[0].mxu0
      %v817 = vadd.f32 %v681, %v816
      %v818 = vpop.f32.mrb[0].mxu0
      %819 = vmatprep.mubr.bf16.mxu0 0
      %820 = vmatmul.mubr.bf16.gmra.mrb[0].mxu0 %v676
      %v821 = vpop.f32.mrb[0].mxu0
      %v822 = vadd.f32 %v681, %v821
      %v823 = vpop.f32.mrb[0].mxu0
      %v824 = vpop.f32.mrb[0].mxu0
      %v825 = vadd.f32 %v681, %v824
      %v826 = vpop.f32.mrb[0].mxu0
      %827 = vdwg.mxu0
      %828 = vst [vmem:[%s280] sm:$0xff] %v766
      %829 = vst [vmem:[%s280 + $0x8] sm:$0xff] %v769
      %830 = vst [vmem:[%s280 + $0x10] sm:$0xff] %v774
      %831 = vst [vmem:[%s280 + $0x18] sm:$0xff] %v777
      %832 = vst [vmem:[%s280 + $0x20] sm:$0xff] %v782
      %833 = vst [vmem:[%s280 + $0x28] sm:$0xff] %v785
      %834 = vst [vmem:[%s280 + $0x30] sm:$0xff] %v790
      %835 = vst [vmem:[%s280 + $0x38] sm:$0xff] %v793
      %836 = vst [vmem:[%s280 + $0x40] sm:$0xff] %v798
      %837 = vst [vmem:[%s280 + $0x48] sm:$0xff] %v801
      %838 = vst [vmem:[%s280 + $0x50] sm:$0xff] %v806
      %839 = vst [vmem:[%s280 + $0x58] sm:$0xff] %v809
      %840 = vst [vmem:[%s280 + $0x60] sm:$0xff] %v814
      %841 = vst [vmem:[%s280 + $0x68] sm:$0xff] %v817
      %842 = vst [vmem:[%s280 + $0x70] sm:$0xff] %v822
      %843 = vst [vmem:[%s280 + $0x78] sm:$0xff] %v825
      %s844 = smul.u32 16, %s18
      %p845 = scmp.lt.s32.totalorder %s844, 31
      %s846 = scalar_select %p845, %s844, 31
      %s847 = smul.addr %s846, 8
      %s848 = scalar_lea.vmem %s7, %s847
      // Predicated region
      $region49: #{dnn_forward.1} parent=47 // pred_check
        %p849 = pneg %p188
      $region50: #{dnn_forward.1} parent=47 // pred_check_branch
        %851 = sbr.rel (%p849) target = $region52
      $region51: #{dnn_forward.1} parent=47 // pred_region
        %s852 = smul.u32 16, %s18
      $region52: #{dnn_forward.1} parent=47 // pred_fallthru
        _
    $region48: #{dnn_forward.1} parent=5 // pred_fallthru
      _
    %p853 = scmp.le.s32.totalorder 2, %s13
    // Predicated region
    $region53: #{dnn_forward.1} parent=5 // pred_check
      %p854 = pneg %p853
    $region54: #{dnn_forward.1} parent=5 // pred_check_branch
      %856 = sbr.rel (%p854) target = $region56
    $region55: #{dnn_forward.1} parent=5 // pred_region
      %s857 = ssub.s32 %s13, 2
      // Predicated region
      $region57: #{dnn_forward.1} parent=55 // pred_check
        %p858 = pneg %p194
      $region58: #{dnn_forward.1} parent=55 // pred_check_branch
        %860 = sbr.rel (%p858) target = $region60
      $region59: #{dnn_forward.1} parent=55 // pred_region
        %s861 = smul.u32 16, %s19
        %p862 = scmp.lt.s32.totalorder %s861, 31
        %s863 = scalar_select %p862, %s861, 31
        %s864 = smul.addr %s863, 8
        %s865 = scalar_lea.vmem %s7, %s864
      $region60: #{dnn_forward.1} parent=55 // pred_fallthru
        _
    $region56: #{dnn_forward.1} parent=5 // pred_fallthru
      _
  $region6: #{dnn_forward.1} parent=0 // loop_footer
    %s17 = sadd.s32 1, %s13
  $region7: #{dnn_forward.1} parent=0 // loop_footer_branch
    %12 = sbr.rel target = $region3
  $region8: #{dnn_forward.1} parent=0 // loop_exit
    _

</llo_original>
